<compile_context>
chip_gen: v7x
topology: tpu7x:2x2x1
jax: 0.10.0
libtpu: 0.0.40
codegen_flags: <defaults>
</compile_context>

<pallas_src>
import jax
import jax.numpy as jnp
from jax.experimental import pallas as pl
from jax.experimental.pallas import tpu as pltpu

B = 2                              # batch
H = W = 4                          # input spatial (cnn_4x4)
C_OUT = 4                          # conv1 out channels
KH = KW = 2                        # conv1 kernel
PAD_H = H + 2                      # padded spatial = 6  (padding=1)
CONV_H = PAD_H - KH + 1            # 5
POOL_H = CONV_H - 2 + 1            # 4  (maxpool k=2, stride=1)
CONV_FLAT = C_OUT * CONV_H * CONV_H    # 100
POOL_FLAT = C_OUT * POOL_H * POOL_H    # 64
N_CLS = 2


def fused_cnn_kernel(x_ref, w_ref, b_ref, wfc_ref, bfc_ref,
                     final_ref, conv_ref, pool_ref, xp_ref):
    """Fused conv2d(1->4,k=2,s=1,pad=1) + ReLU + maxpool(2,s=1) + fc(64->2).

    x_ref:     (B, 1, 4, 4)  f32 VMEM   raw NCHW input
    w_ref:     (C_OUT, 4)    f32 SMEM   conv weights, [c, ki*2+kj]
    b_ref:     (C_OUT,)      f32 SMEM   conv bias
    wfc_ref:   (N_CLS, 64)   f32 VMEM   fc weight (torch layout: c*16+i*4+j)
    bfc_ref:   (N_CLS,)      f32 SMEM   fc bias
    final_ref: (B, 1, N_CLS) f32 VMEM
    conv_ref:  (B, 1, 100)   f32 VMEM   pre-activation conv, flat c*25+i*5+j
    pool_ref:  (B, 1, 64)    f32 VMEM   post-ReLU maxpool,   flat c*16+i*4+j
    xp_ref:    (B, 6, 6)     f32 VMEM scratch (padded input)
    """
    # --- zero-padding done in VMEM (padding=1) ---
    x = x_ref[...][:, 0]                                  # (B, 4, 4)
    xp_ref[...] = jnp.zeros_like(xp_ref)
    xp_ref[:, 1:1 + H, 1:1 + W] = x
    xp = xp_ref[...]                                      # (B, 6, 6)

    # shifted 5x5 windows, one per conv tap (ki, kj), t = ki*2+kj
    wins = [xp[:, ki:ki + CONV_H, kj:kj + CONV_H]          # (B, 5, 5)
            for ki in range(KH) for kj in range(KW)]

    conv_pieces = []
    pool_pieces = []
    for c in range(C_OUT):
        # conv channel c: SMEM scalar weights * shifted windows + bias
        conv_c = b_ref[c] + sum(w_ref[c, t] * wins[t] for t in range(KH * KW))
        conv_pieces += [conv_c[:, i:i + 1, :] for i in range(CONV_H)]   # (B,1,5)

        # ReLU + 2x2 max pool (stride 1)
        r = jnp.maximum(conv_c, 0.0)
        pool_c = jnp.maximum(
            jnp.maximum(r[:, 0:POOL_H, 0:POOL_H], r[:, 0:POOL_H, 1:1 + POOL_H]),
            jnp.maximum(r[:, 1:1 + POOL_H, 0:POOL_H], r[:, 1:1 + POOL_H, 1:1 + POOL_H]),
        )                                                                # (B,4,4)
        pool_pieces += [pool_c[:, i:i + 1, :] for i in range(POOL_H)]    # (B,1,4)

    # lane-dense flat slabs (torch Flatten order): single store / DMA each
    conv_flat = jnp.concatenate(conv_pieces, axis=2)       # (B, 1, 100)
    pool_flat = jnp.concatenate(pool_pieces, axis=2)       # (B, 1, 64)
    conv_ref[...] = conv_flat
    pool_ref[...] = pool_flat

    # --- fc(64 -> 2): flat VPU multiply + one lane reduction per class ---
    wfc = wfc_ref[...]                                     # (N_CLS, 64)
    cols = []
    for n in range(N_CLS):
        prod = pool_flat * wfc[n:n + 1, :]                 # (B, 1, 64)
        cols.append(jnp.sum(prod, axis=-1, keepdims=True) + bfc_ref[n])  # (B,1,1)
    final_ref[...] = jnp.concatenate(cols, axis=2)         # (B, 1, N_CLS)


def pack_params(params):
    """One-time repack of PyTorch-layout params into kernel-ready arrays.

    Called once next to init_params -- NOT on the per-forward path.
    """
    return {
        "w_conv": params["w1"].reshape(C_OUT, KH * KW).astype(jnp.float32),  # [c, ki*2+kj]
        "b_conv": params["b1"].astype(jnp.float32),                          # (C_OUT,)
        "wfc": params["wfc"].astype(jnp.float32),                            # (N_CLS, 64)
        "bfc": params["bfc"].astype(jnp.float32),                            # (N_CLS,)
    }


_VMEM = pl.BlockSpec(memory_space=pltpu.MemorySpace.VMEM)
_SMEM = pl.BlockSpec(memory_space=pltpu.MemorySpace.SMEM)


@jax.jit
def simple_cnn_forward(x, packed):
    """x: (B, 1, 4, 4) f32 NCHW. Returns (final_out, conv_out, pool_out)."""
    final_f, conv_f, pool_f = pl.pallas_call(
        fused_cnn_kernel,
        out_shape=(
            jax.ShapeDtypeStruct((B, 1, N_CLS), jnp.float32),
            jax.ShapeDtypeStruct((B, 1, CONV_FLAT), jnp.float32),
            jax.ShapeDtypeStruct((B, 1, POOL_FLAT), jnp.float32),
        ),
        in_specs=[_VMEM, _SMEM, _SMEM, _VMEM, _SMEM],
        out_specs=(_VMEM, _VMEM, _VMEM),
        scratch_shapes=[pltpu.VMEM((B, PAD_H, PAD_H), jnp.float32)],
        cost_estimate=pl.CostEstimate(flops=3200, transcendentals=0,
                                      bytes_accessed=2600),
    )(x, packed["w_conv"], packed["b_conv"], packed["wfc"], packed["bfc"])

    # reshape back to the module's NCHW interface (cheap, under jit)
    final_out = final_f.reshape(B, N_CLS)
    conv_out = conv_f.reshape(B, C_OUT, CONV_H, CONV_H)
    pool_out = pool_f.reshape(B, C_OUT, POOL_H, POOL_H)
    return final_out, conv_out, pool_out


def init_params(key):
    """Deterministic init mimicking PyTorch default U(-1/sqrt(fan_in), +1/sqrt(fan_in))."""
    k1, k2, k3, k4 = jax.random.split(key, 4)
    fan_conv = 1 * KH * KW
    lim_c = 1.0 / jnp.sqrt(fan_conv)
    fan_fc = POOL_FLAT
    lim_f = 1.0 / jnp.sqrt(fan_fc)
    return {
        "w1": jax.random.uniform(k1, (C_OUT, 1, KH, KW), jnp.float32, -lim_c, lim_c),
        "b1": jax.random.uniform(k2, (C_OUT,), jnp.float32, -lim_c, lim_c),
        "wfc": jax.random.uniform(k3, (N_CLS, POOL_FLAT), jnp.float32, -lim_f, lim_f),
        "bfc": jax.random.uniform(k4, (N_CLS,), jnp.float32, -lim_f, lim_f),
    }


def reference_forward(x, params):
    """Pure-JAX reference for correctness checking."""
    w1, b1, wfc, bfc = params["w1"], params["b1"], params["wfc"], params["bfc"]
    conv = jax.lax.conv_general_dilated(
        x, w1, window_strides=(1, 1), padding=((1, 1), (1, 1)),
        dimension_numbers=("NCHW", "OIHW", "NCHW"),
    ) + b1.reshape(1, C_OUT, 1, 1)
    relu = jnp.maximum(conv, 0.0)
    pool = jax.lax.reduce_window(
        relu, -jnp.inf, jax.lax.max,
        window_dimensions=(1, 1, 2, 2), window_strides=(1, 1, 1, 1), padding="VALID",
    )
    flat = pool.reshape(B, POOL_FLAT)
    final = flat @ wfc.T + bfc
    return final, conv, pool


if __name__ == "__main__":
    key = jax.random.PRNGKey(0)
    x = jax.random.normal(key, (B, 1, H, W), dtype=jnp.float32)
    params = init_params(jax.random.PRNGKey(42))
    packed = pack_params(params)          # hoisted: repack once, not per call

    final_out, conv_out, pool_out = simple_cnn_forward(x, packed)
    jax.block_until_ready((final_out, conv_out, pool_out))

    ref_final, ref_conv, ref_pool = reference_forward(x, params)
    assert jnp.allclose(conv_out, ref_conv, atol=1e-5, rtol=1e-5)
    assert jnp.allclose(pool_out, ref_pool, atol=1e-5, rtol=1e-5)
    assert jnp.allclose(final_out, ref_final, atol=1e-5, rtol=1e-5)
    assert final_out.shape == (B, N_CLS)
    assert conv_out.shape == (B, C_OUT, CONV_H, CONV_H)
    assert pool_out.shape == (B, C_OUT, POOL_H, POOL_H)

    print("KERNEL_OK")
</pallas_src>

<mosaic_0001>
module attributes {stable_mosaic.version = 11 : i64} {
  func.func @fused_cnn_kernel(%arg0: memref<2x1x4x4xf32, #tpu.memory_space<vmem>>, %arg1: memref<4x4xf32, #tpu.memory_space<smem>>, %arg2: memref<4xf32, #tpu.memory_space<smem>>, %arg3: memref<2x64xf32, #tpu.memory_space<vmem>>, %arg4: memref<2xf32, #tpu.memory_space<smem>>, %arg5: memref<2x1x2xf32, #tpu.memory_space<vmem>>, %arg6: memref<2x1x100xf32, #tpu.memory_space<vmem>>, %arg7: memref<2x1x64xf32, #tpu.memory_space<vmem>>, %arg8: memref<2x6x6xf32, #tpu.memory_space<vmem>>) attributes {dimension_semantics = [], scalar_prefetch = 0 : i64, scratch_operands = 1 : i64, tpu.core_type = #tpu.core_type<tc>} {
    %c0 = arith.constant 0 : index
    %c0_0 = arith.constant 0 : index
    %c0_1 = arith.constant 0 : index
    %c0_2 = arith.constant 0 : index
    %0 = vector.load %arg0[%c0, %c0_0, %c0_1, %c0_2] : memref<2x1x4x4xf32, #tpu.memory_space<vmem>>, vector<2x1x4x4xf32>
    %1 = vector.shape_cast %0 : vector<2x1x4x4xf32> to vector<2x4x4xf32>
    %cst = arith.constant 0.000000e+00 : f32
    %2 = vector.broadcast %cst : f32 to vector<2x6x6xf32>
    %c0_3 = arith.constant 0 : index
    %c0_4 = arith.constant 0 : index
    %c0_5 = arith.constant 0 : index
    %3 = vector.load %arg8[%c0_3, %c0_4, %c0_5] : memref<2x6x6xf32, #tpu.memory_space<vmem>>, vector<2x6x6xf32>
    tpu.vector_store %arg8[%c0_3, %c0_4, %c0_5], %2 {strides = array<i32>} : memref<2x6x6xf32, #tpu.memory_space<vmem>>, vector<2x6x6xf32>,
    %c0_6 = arith.constant 0 : index
    %c1 = arith.constant 1 : index
    %c1_7 = arith.constant 1 : index
    %4 = vector.load %arg8[%c0_6, %c1, %c1_7] : memref<2x6x6xf32, #tpu.memory_space<vmem>>, vector<2x4x4xf32>
    tpu.vector_store %arg8[%c0_6, %c1, %c1_7], %1 {strides = array<i32>} : memref<2x6x6xf32, #tpu.memory_space<vmem>>, vector<2x4x4xf32>,
    %c0_8 = arith.constant 0 : index
    %c0_9 = arith.constant 0 : index
    %c0_10 = arith.constant 0 : index
    %5 = vector.load %arg8[%c0_8, %c0_9, %c0_10] : memref<2x6x6xf32, #tpu.memory_space<vmem>>, vector<2x6x6xf32>
    %6 = vector.extract_strided_slice %5 {offsets = [0, 0, 0], sizes = [2, 5, 5], strides = [1, 1, 1]} : vector<2x6x6xf32> to vector<2x5x5xf32>
    %7 = vector.extract_strided_slice %5 {offsets = [0, 0, 1], sizes = [2, 5, 5], strides = [1, 1, 1]} : vector<2x6x6xf32> to vector<2x5x5xf32>
    %8 = vector.extract_strided_slice %5 {offsets = [0, 1, 0], sizes = [2, 5, 5], strides = [1, 1, 1]} : vector<2x6x6xf32> to vector<2x5x5xf32>
    %9 = vector.extract_strided_slice %5 {offsets = [0, 1, 1], sizes = [2, 5, 5], strides = [1, 1, 1]} : vector<2x6x6xf32> to vector<2x5x5xf32>
    %c0_11 = arith.constant 0 : index
    %10 = memref.load %arg2[%c0_11] : memref<4xf32, #tpu.memory_space<smem>>
    %c0_12 = arith.constant 0 : index
    %c0_13 = arith.constant 0 : index
    %11 = memref.load %arg1[%c0_12, %c0_13] : memref<4x4xf32, #tpu.memory_space<smem>>
    %12 = vector.broadcast %11 : f32 to vector<2x5x5xf32>
    %13 = arith.mulf %12, %6 : vector<2x5x5xf32>
    %cst_14 = arith.constant 0.000000e+00 : f32
    %14 = vector.broadcast %cst_14 : f32 to vector<2x5x5xf32>
    %15 = arith.addf %14, %13 : vector<2x5x5xf32>
    %c0_15 = arith.constant 0 : index
    %c1_16 = arith.constant 1 : index
    %16 = memref.load %arg1[%c0_15, %c1_16] : memref<4x4xf32, #tpu.memory_space<smem>>
    %17 = vector.broadcast %16 : f32 to vector<2x5x5xf32>
    %18 = arith.mulf %17, %7 : vector<2x5x5xf32>
    %19 = arith.addf %15, %18 : vector<2x5x5xf32>
    %c0_17 = arith.constant 0 : index
    %c2 = arith.constant 2 : index
    %20 = memref.load %arg1[%c0_17, %c2] : memref<4x4xf32, #tpu.memory_space<smem>>
    %21 = vector.broadcast %20 : f32 to vector<2x5x5xf32>
    %22 = arith.mulf %21, %8 : vector<2x5x5xf32>
    %23 = arith.addf %19, %22 : vector<2x5x5xf32>
    %c0_18 = arith.constant 0 : index
    %c3 = arith.constant 3 : index
    %24 = memref.load %arg1[%c0_18, %c3] : memref<4x4xf32, #tpu.memory_space<smem>>
    %25 = vector.broadcast %24 : f32 to vector<2x5x5xf32>
    %26 = arith.mulf %25, %9 : vector<2x5x5xf32>
    %27 = arith.addf %23, %26 : vector<2x5x5xf32>
    %28 = vector.broadcast %10 : f32 to vector<2x5x5xf32>
    %29 = arith.addf %28, %27 : vector<2x5x5xf32>
    %30 = vector.extract_strided_slice %29 {offsets = [0, 0, 0], sizes = [2, 1, 5], strides = [1, 1, 1]} : vector<2x5x5xf32> to vector<2x1x5xf32>
    %31 = vector.extract_strided_slice %29 {offsets = [0, 1, 0], sizes = [2, 1, 5], strides = [1, 1, 1]} : vector<2x5x5xf32> to vector<2x1x5xf32>
    %32 = vector.extract_strided_slice %29 {offsets = [0, 2, 0], sizes = [2, 1, 5], strides = [1, 1, 1]} : vector<2x5x5xf32> to vector<2x1x5xf32>
    %33 = vector.extract_strided_slice %29 {offsets = [0, 3, 0], sizes = [2, 1, 5], strides = [1, 1, 1]} : vector<2x5x5xf32> to vector<2x1x5xf32>
    %34 = vector.extract_strided_slice %29 {offsets = [0, 4, 0], sizes = [2, 1, 5], strides = [1, 1, 1]} : vector<2x5x5xf32> to vector<2x1x5xf32>
    %cst_19 = arith.constant 0.000000e+00 : f32
    %35 = vector.broadcast %cst_19 : f32 to vector<2x5x5xf32>
    %36 = arith.maximumf %29, %35 : vector<2x5x5xf32>
    %37 = vector.extract_strided_slice %36 {offsets = [0, 0, 0], sizes = [2, 4, 4], strides = [1, 1, 1]} : vector<2x5x5xf32> to vector<2x4x4xf32>
    %38 = vector.extract_strided_slice %36 {offsets = [0, 0, 1], sizes = [2, 4, 4], strides = [1, 1, 1]} : vector<2x5x5xf32> to vector<2x4x4xf32>
    %39 = arith.maximumf %37, %38 : vector<2x4x4xf32>
    %40 = vector.extract_strided_slice %36 {offsets = [0, 1, 0], sizes = [2, 4, 4], strides = [1, 1, 1]} : vector<2x5x5xf32> to vector<2x4x4xf32>
    %41 = vector.extract_strided_slice %36 {offsets = [0, 1, 1], sizes = [2, 4, 4], strides = [1, 1, 1]} : vector<2x5x5xf32> to vector<2x4x4xf32>
    %42 = arith.maximumf %40, %41 : vector<2x4x4xf32>
    %43 = arith.maximumf %39, %42 : vector<2x4x4xf32>
    %44 = vector.extract_strided_slice %43 {offsets = [0, 0, 0], sizes = [2, 1, 4], strides = [1, 1, 1]} : vector<2x4x4xf32> to vector<2x1x4xf32>
    %45 = vector.extract_strided_slice %43 {offsets = [0, 1, 0], sizes = [2, 1, 4], strides = [1, 1, 1]} : vector<2x4x4xf32> to vector<2x1x4xf32>
    %46 = vector.extract_strided_slice %43 {offsets = [0, 2, 0], sizes = [2, 1, 4], strides = [1, 1, 1]} : vector<2x4x4xf32> to vector<2x1x4xf32>
    %47 = vector.extract_strided_slice %43 {offsets = [0, 3, 0], sizes = [2, 1, 4], strides = [1, 1, 1]} : vector<2x4x4xf32> to vector<2x1x4xf32>
    %c1_20 = arith.constant 1 : index
    %48 = memref.load %arg2[%c1_20] : memref<4xf32, #tpu.memory_space<smem>>
    %c1_21 = arith.constant 1 : index
    %c0_22 = arith.constant 0 : index
    %49 = memref.load %arg1[%c1_21, %c0_22] : memref<4x4xf32, #tpu.memory_space<smem>>
    %50 = vector.broadcast %49 : f32 to vector<2x5x5xf32>
    %51 = arith.mulf %50, %6 : vector<2x5x5xf32>
    %cst_23 = arith.constant 0.000000e+00 : f32
    %52 = vector.broadcast %cst_23 : f32 to vector<2x5x5xf32>
    %53 = arith.addf %52, %51 : vector<2x5x5xf32>
    %c1_24 = arith.constant 1 : index
    %c1_25 = arith.constant 1 : index
    %54 = memref.load %arg1[%c1_24, %c1_25] : memref<4x4xf32, #tpu.memory_space<smem>>
    %55 = vector.broadcast %54 : f32 to vector<2x5x5xf32>
    %56 = arith.mulf %55, %7 : vector<2x5x5xf32>
    %57 = arith.addf %53, %56 : vector<2x5x5xf32>
    %c1_26 = arith.constant 1 : index
    %c2_27 = arith.constant 2 : index
    %58 = memref.load %arg1[%c1_26, %c2_27] : memref<4x4xf32, #tpu.memory_space<smem>>
    %59 = vector.broadcast %58 : f32 to vector<2x5x5xf32>
    %60 = arith.mulf %59, %8 : vector<2x5x5xf32>
    %61 = arith.addf %57, %60 : vector<2x5x5xf32>
    %c1_28 = arith.constant 1 : index
    %c3_29 = arith.constant 3 : index
    %62 = memref.load %arg1[%c1_28, %c3_29] : memref<4x4xf32, #tpu.memory_space<smem>>
    %63 = vector.broadcast %62 : f32 to vector<2x5x5xf32>
    %64 = arith.mulf %63, %9 : vector<2x5x5xf32>
    %65 = arith.addf %61, %64 : vector<2x5x5xf32>
    %66 = vector.broadcast %48 : f32 to vector<2x5x5xf32>
    %67 = arith.addf %66, %65 : vector<2x5x5xf32>
    %68 = vector.extract_strided_slice %67 {offsets = [0, 0, 0], sizes = [2, 1, 5], strides = [1, 1, 1]} : vector<2x5x5xf32> to vector<2x1x5xf32>
    %69 = vector.extract_strided_slice %67 {offsets = [0, 1, 0], sizes = [2, 1, 5], strides = [1, 1, 1]} : vector<2x5x5xf32> to vector<2x1x5xf32>
    %70 = vector.extract_strided_slice %67 {offsets = [0, 2, 0], sizes = [2, 1, 5], strides = [1, 1, 1]} : vector<2x5x5xf32> to vector<2x1x5xf32>
    %71 = vector.extract_strided_slice %67 {offsets = [0, 3, 0], sizes = [2, 1, 5], strides = [1, 1, 1]} : vector<2x5x5xf32> to vector<2x1x5xf32>
    %72 = vector.extract_strided_slice %67 {offsets = [0, 4, 0], sizes = [2, 1, 5], strides = [1, 1, 1]} : vector<2x5x5xf32> to vector<2x1x5xf32>
    %cst_30 = arith.constant 0.000000e+00 : f32
    %73 = vector.broadcast %cst_30 : f32 to vector<2x5x5xf32>
    %74 = arith.maximumf %67, %73 : vector<2x5x5xf32>
    %75 = vector.extract_strided_slice %74 {offsets = [0, 0, 0], sizes = [2, 4, 4], strides = [1, 1, 1]} : vector<2x5x5xf32> to vector<2x4x4xf32>
    %76 = vector.extract_strided_slice %74 {offsets = [0, 0, 1], sizes = [2, 4, 4], strides = [1, 1, 1]} : vector<2x5x5xf32> to vector<2x4x4xf32>
    %77 = arith.maximumf %75, %76 : vector<2x4x4xf32>
    %78 = vector.extract_strided_slice %74 {offsets = [0, 1, 0], sizes = [2, 4, 4], strides = [1, 1, 1]} : vector<2x5x5xf32> to vector<2x4x4xf32>
    %79 = vector.extract_strided_slice %74 {offsets = [0, 1, 1], sizes = [2, 4, 4], strides = [1, 1, 1]} : vector<2x5x5xf32> to vector<2x4x4xf32>
    %80 = arith.maximumf %78, %79 : vector<2x4x4xf32>
    %81 = arith.maximumf %77, %80 : vector<2x4x4xf32>
    %82 = vector.extract_strided_slice %81 {offsets = [0, 0, 0], sizes = [2, 1, 4], strides = [1, 1, 1]} : vector<2x4x4xf32> to vector<2x1x4xf32>
    %83 = vector.extract_strided_slice %81 {offsets = [0, 1, 0], sizes = [2, 1, 4], strides = [1, 1, 1]} : vector<2x4x4xf32> to vector<2x1x4xf32>
    %84 = vector.extract_strided_slice %81 {offsets = [0, 2, 0], sizes = [2, 1, 4], strides = [1, 1, 1]} : vector<2x4x4xf32> to vector<2x1x4xf32>
    %85 = vector.extract_strided_slice %81 {offsets = [0, 3, 0], sizes = [2, 1, 4], strides = [1, 1, 1]} : vector<2x4x4xf32> to vector<2x1x4xf32>
    %c2_31 = arith.constant 2 : index
    %86 = memref.load %arg2[%c2_31] : memref<4xf32, #tpu.memory_space<smem>>
    %c2_32 = arith.constant 2 : index
    %c0_33 = arith.constant 0 : index
    %87 = memref.load %arg1[%c2_32, %c0_33] : memref<4x4xf32, #tpu.memory_space<smem>>
    %88 = vector.broadcast %87 : f32 to vector<2x5x5xf32>
    %89 = arith.mulf %88, %6 : vector<2x5x5xf32>
    %cst_34 = arith.constant 0.000000e+00 : f32
    %90 = vector.broadcast %cst_34 : f32 to vector<2x5x5xf32>
    %91 = arith.addf %90, %89 : vector<2x5x5xf32>
    %c2_35 = arith.constant 2 : index
    %c1_36 = arith.constant 1 : index
    %92 = memref.load %arg1[%c2_35, %c1_36] : memref<4x4xf32, #tpu.memory_space<smem>>
    %93 = vector.broadcast %92 : f32 to vector<2x5x5xf32>
    %94 = arith.mulf %93, %7 : vector<2x5x5xf32>
    %95 = arith.addf %91, %94 : vector<2x5x5xf32>
    %c2_37 = arith.constant 2 : index
    %c2_38 = arith.constant 2 : index
    %96 = memref.load %arg1[%c2_37, %c2_38] : memref<4x4xf32, #tpu.memory_space<smem>>
    %97 = vector.broadcast %96 : f32 to vector<2x5x5xf32>
    %98 = arith.mulf %97, %8 : vector<2x5x5xf32>
    %99 = arith.addf %95, %98 : vector<2x5x5xf32>
    %c2_39 = arith.constant 2 : index
    %c3_40 = arith.constant 3 : index
    %100 = memref.load %arg1[%c2_39, %c3_40] : memref<4x4xf32, #tpu.memory_space<smem>>
    %101 = vector.broadcast %100 : f32 to vector<2x5x5xf32>
    %102 = arith.mulf %101, %9 : vector<2x5x5xf32>
    %103 = arith.addf %99, %102 : vector<2x5x5xf32>
    %104 = vector.broadcast %86 : f32 to vector<2x5x5xf32>
    %105 = arith.addf %104, %103 : vector<2x5x5xf32>
    %106 = vector.extract_strided_slice %105 {offsets = [0, 0, 0], sizes = [2, 1, 5], strides = [1, 1, 1]} : vector<2x5x5xf32> to vector<2x1x5xf32>
    %107 = vector.extract_strided_slice %105 {offsets = [0, 1, 0], sizes = [2, 1, 5], strides = [1, 1, 1]} : vector<2x5x5xf32> to vector<2x1x5xf32>
    %108 = vector.extract_strided_slice %105 {offsets = [0, 2, 0], sizes = [2, 1, 5], strides = [1, 1, 1]} : vector<2x5x5xf32> to vector<2x1x5xf32>
    %109 = vector.extract_strided_slice %105 {offsets = [0, 3, 0], sizes = [2, 1, 5], strides = [1, 1, 1]} : vector<2x5x5xf32> to vector<2x1x5xf32>
    %110 = vector.extract_strided_slice %105 {offsets = [0, 4, 0], sizes = [2, 1, 5], strides = [1, 1, 1]} : vector<2x5x5xf32> to vector<2x1x5xf32>
    %cst_41 = arith.constant 0.000000e+00 : f32
    %111 = vector.broadcast %cst_41 : f32 to vector<2x5x5xf32>
    %112 = arith.maximumf %105, %111 : vector<2x5x5xf32>
    %113 = vector.extract_strided_slice %112 {offsets = [0, 0, 0], sizes = [2, 4, 4], strides = [1, 1, 1]} : vector<2x5x5xf32> to vector<2x4x4xf32>
    %114 = vector.extract_strided_slice %112 {offsets = [0, 0, 1], sizes = [2, 4, 4], strides = [1, 1, 1]} : vector<2x5x5xf32> to vector<2x4x4xf32>
    %115 = arith.maximumf %113, %114 : vector<2x4x4xf32>
    %116 = vector.extract_strided_slice %112 {offsets = [0, 1, 0], sizes = [2, 4, 4], strides = [1, 1, 1]} : vector<2x5x5xf32> to vector<2x4x4xf32>
    %117 = vector.extract_strided_slice %112 {offsets = [0, 1, 1], sizes = [2, 4, 4], strides = [1, 1, 1]} : vector<2x5x5xf32> to vector<2x4x4xf32>
    %118 = arith.maximumf %116, %117 : vector<2x4x4xf32>
    %119 = arith.maximumf %115, %118 : vector<2x4x4xf32>
    %120 = vector.extract_strided_slice %119 {offsets = [0, 0, 0], sizes = [2, 1, 4], strides = [1, 1, 1]} : vector<2x4x4xf32> to vector<2x1x4xf32>
    %121 = vector.extract_strided_slice %119 {offsets = [0, 1, 0], sizes = [2, 1, 4], strides = [1, 1, 1]} : vector<2x4x4xf32> to vector<2x1x4xf32>
    %122 = vector.extract_strided_slice %119 {offsets = [0, 2, 0], sizes = [2, 1, 4], strides = [1, 1, 1]} : vector<2x4x4xf32> to vector<2x1x4xf32>
    %123 = vector.extract_strided_slice %119 {offsets = [0, 3, 0], sizes = [2, 1, 4], strides = [1, 1, 1]} : vector<2x4x4xf32> to vector<2x1x4xf32>
    %c3_42 = arith.constant 3 : index
    %124 = memref.load %arg2[%c3_42] : memref<4xf32, #tpu.memory_space<smem>>
    %c3_43 = arith.constant 3 : index
    %c0_44 = arith.constant 0 : index
    %125 = memref.load %arg1[%c3_43, %c0_44] : memref<4x4xf32, #tpu.memory_space<smem>>
    %126 = vector.broadcast %125 : f32 to vector<2x5x5xf32>
    %127 = arith.mulf %126, %6 : vector<2x5x5xf32>
    %cst_45 = arith.constant 0.000000e+00 : f32
    %128 = vector.broadcast %cst_45 : f32 to vector<2x5x5xf32>
    %129 = arith.addf %128, %127 : vector<2x5x5xf32>
    %c3_46 = arith.constant 3 : index
    %c1_47 = arith.constant 1 : index
    %130 = memref.load %arg1[%c3_46, %c1_47] : memref<4x4xf32, #tpu.memory_space<smem>>
    %131 = vector.broadcast %130 : f32 to vector<2x5x5xf32>
    %132 = arith.mulf %131, %7 : vector<2x5x5xf32>
    %133 = arith.addf %129, %132 : vector<2x5x5xf32>
    %c3_48 = arith.constant 3 : index
    %c2_49 = arith.constant 2 : index
    %134 = memref.load %arg1[%c3_48, %c2_49] : memref<4x4xf32, #tpu.memory_space<smem>>
    %135 = vector.broadcast %134 : f32 to vector<2x5x5xf32>
    %136 = arith.mulf %135, %8 : vector<2x5x5xf32>
    %137 = arith.addf %133, %136 : vector<2x5x5xf32>
    %c3_50 = arith.constant 3 : index
    %c3_51 = arith.constant 3 : index
    %138 = memref.load %arg1[%c3_50, %c3_51] : memref<4x4xf32, #tpu.memory_space<smem>>
    %139 = vector.broadcast %138 : f32 to vector<2x5x5xf32>
    %140 = arith.mulf %139, %9 : vector<2x5x5xf32>
    %141 = arith.addf %137, %140 : vector<2x5x5xf32>
    %142 = vector.broadcast %124 : f32 to vector<2x5x5xf32>
    %143 = arith.addf %142, %141 : vector<2x5x5xf32>
    %144 = vector.extract_strided_slice %143 {offsets = [0, 0, 0], sizes = [2, 1, 5], strides = [1, 1, 1]} : vector<2x5x5xf32> to vector<2x1x5xf32>
    %145 = vector.extract_strided_slice %143 {offsets = [0, 1, 0], sizes = [2, 1, 5], strides = [1, 1, 1]} : vector<2x5x5xf32> to vector<2x1x5xf32>
    %146 = vector.extract_strided_slice %143 {offsets = [0, 2, 0], sizes = [2, 1, 5], strides = [1, 1, 1]} : vector<2x5x5xf32> to vector<2x1x5xf32>
    %147 = vector.extract_strided_slice %143 {offsets = [0, 3, 0], sizes = [2, 1, 5], strides = [1, 1, 1]} : vector<2x5x5xf32> to vector<2x1x5xf32>
    %148 = vector.extract_strided_slice %143 {offsets = [0, 4, 0], sizes = [2, 1, 5], strides = [1, 1, 1]} : vector<2x5x5xf32> to vector<2x1x5xf32>
    %cst_52 = arith.constant 0.000000e+00 : f32
    %149 = vector.broadcast %cst_52 : f32 to vector<2x5x5xf32>
    %150 = arith.maximumf %143, %149 : vector<2x5x5xf32>
    %151 = vector.extract_strided_slice %150 {offsets = [0, 0, 0], sizes = [2, 4, 4], strides = [1, 1, 1]} : vector<2x5x5xf32> to vector<2x4x4xf32>
    %152 = vector.extract_strided_slice %150 {offsets = [0, 0, 1], sizes = [2, 4, 4], strides = [1, 1, 1]} : vector<2x5x5xf32> to vector<2x4x4xf32>
    %153 = arith.maximumf %151, %152 : vector<2x4x4xf32>
    %154 = vector.extract_strided_slice %150 {offsets = [0, 1, 0], sizes = [2, 4, 4], strides = [1, 1, 1]} : vector<2x5x5xf32> to vector<2x4x4xf32>
    %155 = vector.extract_strided_slice %150 {offsets = [0, 1, 1], sizes = [2, 4, 4], strides = [1, 1, 1]} : vector<2x5x5xf32> to vector<2x4x4xf32>
    %156 = arith.maximumf %154, %155 : vector<2x4x4xf32>
    %157 = arith.maximumf %153, %156 : vector<2x4x4xf32>
    %158 = vector.extract_strided_slice %157 {offsets = [0, 0, 0], sizes = [2, 1, 4], strides = [1, 1, 1]} : vector<2x4x4xf32> to vector<2x1x4xf32>
    %159 = vector.extract_strided_slice %157 {offsets = [0, 1, 0], sizes = [2, 1, 4], strides = [1, 1, 1]} : vector<2x4x4xf32> to vector<2x1x4xf32>
    %160 = vector.extract_strided_slice %157 {offsets = [0, 2, 0], sizes = [2, 1, 4], strides = [1, 1, 1]} : vector<2x4x4xf32> to vector<2x1x4xf32>
    %161 = vector.extract_strided_slice %157 {offsets = [0, 3, 0], sizes = [2, 1, 4], strides = [1, 1, 1]} : vector<2x4x4xf32> to vector<2x1x4xf32>
    %162 = tpu.concatenate %30, %31, %32, %33, %34, %68, %69, %70, %71, %72, %106, %107, %108, %109, %110, %144 in 2 : vector<2x1x5xf32>, vector<2x1x5xf32>, vector<2x1x5xf32>, vector<2x1x5xf32>, vector<2x1x5xf32>, vector<2x1x5xf32>, vector<2x1x5xf32>, vector<2x1x5xf32>, vector<2x1x5xf32>, vector<2x1x5xf32>, vector<2x1x5xf32>, vector<2x1x5xf32>, vector<2x1x5xf32>, vector<2x1x5xf32>, vector<2x1x5xf32>, vector<2x1x5xf32> -> vector<2x1x80xf32>
    %163 = tpu.concatenate %145, %146, %147, %148 in 2 : vector<2x1x5xf32>, vector<2x1x5xf32>, vector<2x1x5xf32>, vector<2x1x5xf32> -> vector<2x1x20xf32>
    %164 = tpu.concatenate %162, %163 in 2 : vector<2x1x80xf32>, vector<2x1x20xf32> -> vector<2x1x100xf32>
    %165 = tpu.concatenate %44, %45, %46, %47, %82, %83, %84, %85, %120, %121, %122, %123, %158, %159, %160, %161 in 2 : vector<2x1x4xf32>, vector<2x1x4xf32>, vector<2x1x4xf32>, vector<2x1x4xf32>, vector<2x1x4xf32>, vector<2x1x4xf32>, vector<2x1x4xf32>, vector<2x1x4xf32>, vector<2x1x4xf32>, vector<2x1x4xf32>, vector<2x1x4xf32>, vector<2x1x4xf32>, vector<2x1x4xf32>, vector<2x1x4xf32>, vector<2x1x4xf32>, vector<2x1x4xf32> -> vector<2x1x64xf32>
    %c0_53 = arith.constant 0 : index
    %c0_54 = arith.constant 0 : index
    %c0_55 = arith.constant 0 : index
    %166 = vector.load %arg6[%c0_53, %c0_54, %c0_55] : memref<2x1x100xf32, #tpu.memory_space<vmem>>, vector<2x1x100xf32>
    tpu.vector_store %arg6[%c0_53, %c0_54, %c0_55], %164 {strides = array<i32>} : memref<2x1x100xf32, #tpu.memory_space<vmem>>, vector<2x1x100xf32>,
    %c0_56 = arith.constant 0 : index
    %c0_57 = arith.constant 0 : index
    %c0_58 = arith.constant 0 : index
    %167 = vector.load %arg7[%c0_56, %c0_57, %c0_58] : memref<2x1x64xf32, #tpu.memory_space<vmem>>, vector<2x1x64xf32>
    tpu.vector_store %arg7[%c0_56, %c0_57, %c0_58], %165 {strides = array<i32>} : memref<2x1x64xf32, #tpu.memory_space<vmem>>, vector<2x1x64xf32>,
    %c0_59 = arith.constant 0 : index
    %c0_60 = arith.constant 0 : index
    %168 = vector.load %arg3[%c0_59, %c0_60] : memref<2x64xf32, #tpu.memory_space<vmem>>, vector<2x64xf32>
    %169 = vector.extract_strided_slice %168 {offsets = [0, 0], sizes = [1, 64], strides = [1, 1]} : vector<2x64xf32> to vector<1x64xf32>
    %170 = vector.shape_cast %169 : vector<1x64xf32> to vector<1x1x64xf32>
    %171 = vector.broadcast %170 : vector<1x1x64xf32> to vector<2x1x64xf32>
    %172 = arith.mulf %165, %171 : vector<2x1x64xf32>
    %cst_61 = arith.constant dense<0.000000e+00> : vector<2x1xf32>
    %173 = vector.multi_reduction <add>, %172, %cst_61 [2] : vector<2x1x64xf32> to vector<2x1xf32>
    %174 = vector.shape_cast %173 : vector<2x1xf32> to vector<2x1x1xf32>
    %c0_62 = arith.constant 0 : index
    %175 = memref.load %arg4[%c0_62] : memref<2xf32, #tpu.memory_space<smem>>
    %176 = vector.broadcast %175 : f32 to vector<2x1x1xf32>
    %177 = arith.addf %174, %176 : vector<2x1x1xf32>
    %178 = vector.extract_strided_slice %168 {offsets = [1, 0], sizes = [1, 64], strides = [1, 1]} : vector<2x64xf32> to vector<1x64xf32>
    %179 = vector.shape_cast %178 : vector<1x64xf32> to vector<1x1x64xf32>
    %180 = vector.broadcast %179 : vector<1x1x64xf32> to vector<2x1x64xf32>
    %181 = arith.mulf %165, %180 : vector<2x1x64xf32>
    %cst_63 = arith.constant dense<0.000000e+00> : vector<2x1xf32>
    %182 = vector.multi_reduction <add>, %181, %cst_63 [2] : vector<2x1x64xf32> to vector<2x1xf32>
    %183 = vector.shape_cast %182 : vector<2x1xf32> to vector<2x1x1xf32>
    %c1_64 = arith.constant 1 : index
    %184 = memref.load %arg4[%c1_64] : memref<2xf32, #tpu.memory_space<smem>>
    %185 = vector.broadcast %184 : f32 to vector<2x1x1xf32>
    %186 = arith.addf %183, %185 : vector<2x1x1xf32>
    %187 = tpu.concatenate %177, %186 in 2 : vector<2x1x1xf32>, vector<2x1x1xf32> -> vector<2x1x2xf32>
    %c0_65 = arith.constant 0 : index
    %c0_66 = arith.constant 0 : index
    %c0_67 = arith.constant 0 : index
    %188 = vector.load %arg5[%c0_65, %c0_66, %c0_67] : memref<2x1x2xf32, #tpu.memory_space<vmem>>, vector<2x1x2xf32>
    tpu.vector_store %arg5[%c0_65, %c0_66, %c0_67], %187 {strides = array<i32>} : memref<2x1x2xf32, #tpu.memory_space<vmem>>, vector<2x1x2xf32>,
    return
  }
}

</mosaic_0001>

<llo_original>
// kernel: simple_cnn_forward.1
$region0: #{simple_cnn_forward.1}
  #allocation0 [shape = 'u32[]', space=smem, size = 0x4, offset = 0x4, fixed_abs, tag = 'smem constant byte address 0x4 - core index']
  #allocation1 [shape = 'u32[144,128]{1,0:T(1,128)}', space=vmem, size = 0x12000, scoped, tag = 'internal scratch']
  #allocation2 [shape = 'f32[2,6,6]{2,1,0:T(8,128)}', space=vmem, size = 0x2000, scoped, tag = 'scratch operand']
  %s0 = inlined_call_operand.hbm [shape: f32[2,1,4,4], index: 0, kind: input, shape index: {}]
  %s1 = inlined_call_operand.vmem [shape: f32[4,4], index: 1, kind: input, shape index: {}]
  %s2 = inlined_call_operand.vmem [shape: f32[4], index: 2, kind: input, shape index: {}]
  %s3 = inlined_call_operand.vmem [shape: f32[2,64], index: 3, kind: input, shape index: {}]
  %s4 = inlined_call_operand.vmem [shape: f32[2], index: 4, kind: input, shape index: {}]
  %s5 = inlined_call_operand.hbm [shape: f32[2,1,2], index: 5, kind: output, shape index: {0}]
  %s6 = inlined_call_operand.vmem [shape: f32[2,1,100], index: 6, kind: output, shape index: {1}]
  %s7 = inlined_call_operand.vmem [shape: f32[2,1,64], index: 7, kind: output, shape index: {2}]
  %8 = xla_tuple %s5, %s6, %s7
  %s9 = sld [smem:[#allocation0]]
  $region62: #{simple_cnn_forward.1} parent=0
    _
  %s11 = ssub.s32 1, %s9
  %s12 = scalar_select 0, %s11, %s9
  $region1: #{simple_cnn_forward.1} parent=0
    #allocation3 [shape = 'u8[4096]{0}', space=vmem, size = 0x1000, scoped, tag = 'input window, operand 0, single buffered']
    #allocation4 [shape = 's32[1]{0}', space=sflag, size = 0x4, scoped, tag = 'scoped memory for simple_cnn_forward.1']
    #allocation5 [shape = 's32[1]{0}', space=sflag, size = 0x4, scoped, tag = 'scoped memory for simple_cnn_forward.1']
    #allocation6 [shape = 's32[1]{0}', space=sflag, size = 0x4, scoped, tag = 'scoped memory for simple_cnn_forward.1']
    #allocation7 [shape = 'u8[2048]{0}', space=smem, size = 0x800, scoped, tag = 'input window, operand 1, single buffered']
    #allocation8 [shape = 'u8[512]{0}', space=smem, size = 0x200, scoped, tag = 'input window, operand 2, single buffered']
    #allocation9 [shape = 's32[1]{0}', space=sflag, size = 0x4, scoped, tag = 'scoped memory for simple_cnn_forward.1']
    #allocation10 [shape = 'u8[512]{0}', space=smem, size = 0x200, scoped, tag = 'input window, operand 4, single buffered']
    #allocation11 [shape = 'u8[1024]{0}', space=vmem, size = 0x400, scoped, tag = 'output window, operand 0, single buffered']
    %13 = vsyncpa [#allocation4], 0
    %14 = vsyncpa [#allocation6], 0
    %15 = vsyncpa [#allocation9], 0
    %16 = vsyncpa [#allocation5], 0
    // Predicated region
    $region2: #{simple_cnn_forward.1} parent=1 // pred_check
      _
    $region3: #{simple_cnn_forward.1} parent=1 // pred_check_branch
      %18 = sbr.rel (0) target = $region5
    $region4: #{simple_cnn_forward.1} parent=1 // pred_region
      %s20 = ssub.s32 128, 128
      %21 = vsyncadd [#allocation4], %s20
      %s22 = sshll.u32 [#allocation3], 4
      %s23 = int_to_ptr.vmem [resolvable:$true] %s22
      %28 = dma.hbm_to_vmem [thread:$0]  %s0, 128, %s23, [#allocation4], 64, 64, 4
    $region5: #{simple_cnn_forward.1} parent=1 // pred_fallthru
      _
    // Predicated region
    $region6: #{simple_cnn_forward.1} parent=1 // pred_check
      _
    $region7: #{simple_cnn_forward.1} parent=1 // pred_check_branch
      %30 = sbr.rel (0) target = $region9
    $region8: #{simple_cnn_forward.1} parent=1 // pred_region
      %s32 = ssub.s32 64, 64
      %33 = vsyncadd [#allocation6], %s32
      %s35 = sshll.u32 %s1, 4
      %s36 = int_to_ptr.vmem [resolvable:$true] %s35
      %38 = dma.vmem_to_smem %s36, 64, [#allocation7], [#allocation6]
    $region9: #{simple_cnn_forward.1} parent=1 // pred_fallthru
      _
    // Predicated region
    $region10: #{simple_cnn_forward.1} parent=1 // pred_check
      _
    $region11: #{simple_cnn_forward.1} parent=1 // pred_check_branch
      %40 = sbr.rel (0) target = $region13
    $region12: #{simple_cnn_forward.1} parent=1 // pred_region
      %s42 = ssub.s32 16, 16
      %43 = vsyncadd [#allocation9], %s42
      %s45 = sshll.u32 %s2, 4
      %s46 = int_to_ptr.vmem [resolvable:$true] %s45
      %48 = dma.vmem_to_smem %s46, 16, [#allocation8], [#allocation9]
    $region13: #{simple_cnn_forward.1} parent=1 // pred_fallthru
      _
    // Predicated region
    $region14: #{simple_cnn_forward.1} parent=1 // pred_check
      _
    $region15: #{simple_cnn_forward.1} parent=1 // pred_check_branch
      %50 = sbr.rel (0) target = $region17
    $region16: #{simple_cnn_forward.1} parent=1 // pred_region
      _
    $region17: #{simple_cnn_forward.1} parent=1 // pred_fallthru
      _
    // Predicated region
    $region18: #{simple_cnn_forward.1} parent=1 // pred_check
      _
    $region19: #{simple_cnn_forward.1} parent=1 // pred_check_branch
      %52 = sbr.rel (0) target = $region21
    $region20: #{simple_cnn_forward.1} parent=1 // pred_region
      %s54 = ssub.s32 16, 16
      %55 = vsyncadd [#allocation9], %s54
      %s57 = sshll.u32 %s4, 4
      %s58 = int_to_ptr.vmem [resolvable:$true] %s57
      %60 = dma.vmem_to_smem %s58, 16, [#allocation10], [#allocation9]
    $region21: #{simple_cnn_forward.1} parent=1 // pred_fallthru
      _
    // Predicated region
    $region22: #{simple_cnn_forward.1} parent=1 // pred_check
      _
    $region23: #{simple_cnn_forward.1} parent=1 // pred_check_branch
      %62 = sbr.rel (0) target = $region25
    $region24: #{simple_cnn_forward.1} parent=1 // pred_region
      %63 = dma.done [#allocation4], 128
    $region25: #{simple_cnn_forward.1} parent=1 // pred_fallthru
      _
    // Predicated region
    $region26: #{simple_cnn_forward.1} parent=1 // pred_check
      _
    $region27: #{simple_cnn_forward.1} parent=1 // pred_check_branch
      %65 = sbr.rel (0) target = $region29
    $region28: #{simple_cnn_forward.1} parent=1 // pred_region
      %66 = dma.done [#allocation6], 64
    $region29: #{simple_cnn_forward.1} parent=1 // pred_fallthru
      _
    // Predicated region
    $region30: #{simple_cnn_forward.1} parent=1 // pred_check
      _
    $region31: #{simple_cnn_forward.1} parent=1 // pred_check_branch
      %68 = sbr.rel (0) target = $region33
    $region32: #{simple_cnn_forward.1} parent=1 // pred_region
      %69 = dma.done [#allocation9], 16
    $region33: #{simple_cnn_forward.1} parent=1 // pred_fallthru
      _
    // Predicated region
    $region34: #{simple_cnn_forward.1} parent=1 // pred_check
      _
    $region35: #{simple_cnn_forward.1} parent=1 // pred_check_branch
      %71 = sbr.rel (0) target = $region37
    $region36: #{simple_cnn_forward.1} parent=1 // pred_region
      %72 = dma.done [#allocation9], 16
    $region37: #{simple_cnn_forward.1} parent=1 // pred_fallthru
      _
    %73 = sfence
    %v74 = vld [vmem:[#allocation3] sm:$0xf]
    %v75 = vld [vmem:[#allocation3 + $0x4] sm:$0xf]
    %vm76 = vcmask 46080
    %77 = vst.msk [vmem:[#allocation2] sm:$0x3f] %vm76, 0.0
    %78 = vst.msk [vmem:[#allocation2 + $0x8] sm:$0x3f] %vm76, 0.0
    %81 = vrot.lane.b32.xlu0 %v74, 1
    %v82 = vpop.permute.xlu0 %81
    %83 = vrot.lane.b32.xlu0 %v75, 1
    %v84 = vpop.permute.xlu0 %83
    %vm87 = vcmask 35848
    %88 = vst.msk [vmem:[#allocation2 + $0x1] sm:$0xf] %vm87, %v82
    %89 = vst.msk [vmem:[#allocation2 + $0x9] sm:$0xf] %vm87, %v84
    %v90 = vld [vmem:[#allocation2] sm:$0x3f]
    %v91 = vld [vmem:[#allocation2 + $0x8] sm:$0x3f]
    %s92 = sld [smem:[#allocation8]]
    %s93 = sld [smem:[#allocation7]]
    %v94 = vstv %s93
    %v95 = vmul.f32 %v94, %v90
    %v96 = vmul.f32 %v94, %v91
    %v97 = vadd.f32 %v95, 0.0
    %v98 = vadd.f32 %v96, 0.0
    %s99 = sld [smem:[#allocation7 + $0x1]]
    %v100 = vstv %s99
    %v101 = vmul.f32 %v100, %v90
    %v102 = vmul.f32 %v100, %v91
    %105 = vrot.lane.b32.xlu0 %v101, 127
    %v106 = vpop.permute.xlu0 %105
    %107 = vrot.lane.b32.xlu0 %v102, 127
    %v108 = vpop.permute.xlu0 %107
    %v111 = vadd.f32 %v97, %v106
    %v112 = vadd.f32 %v98, %v108
    %s113 = sld [smem:[#allocation7 + $0x2]]
    %v114 = vstv %s113
    %v115 = vmul.f32 %v114, %v90
    %v116 = vmul.f32 %v114, %v91
    %v119 = vrot.slane %v115, 1
    %v120 = vrot.slane %v116, 1
    %v123 = vadd.f32 %v111, %v119
    %v124 = vadd.f32 %v112, %v120
    %s125 = sld [smem:[#allocation7 + $0x3]]
    %v126 = vstv %s125
    %v127 = vmul.f32 %v126, %v90
    %v128 = vmul.f32 %v126, %v91
    %v131 = vrot.slane %v127, 1
    %v132 = vrot.slane %v128, 1
    %133 = vrot.lane.b32.xlu0 %v131, 127
    %v134 = vpop.permute.xlu0 %133
    %135 = vrot.lane.b32.xlu0 %v132, 127
    %v136 = vpop.permute.xlu0 %135
    %v139 = vadd.f32 %v123, %v134
    %v140 = vadd.f32 %v124, %v136
    %v141 = vstv %s92
    %v142 = vadd.f32 %v141, %v139
    %v143 = vadd.f32 %v141, %v140
    %v144 = vmax.f32 %v142, 0.0
    %v145 = vmax.f32 %v143, 0.0
    %148 = vrot.lane.b32.xlu0 %v144, 127
    %v149 = vpop.permute.xlu0 %148
    %150 = vrot.lane.b32.xlu0 %v145, 127
    %v151 = vpop.permute.xlu0 %150
    %v154 = vmax.f32 %v144, %v149
    %v155 = vmax.f32 %v145, %v151
    %v158 = vrot.slane %v154, 1
    %v159 = vrot.slane %v155, 1
    %v162 = vmax.f32 %v154, %v158
    %v163 = vmax.f32 %v155, %v159
    %s164 = sld [smem:[#allocation8 + $0x1]]
    %s165 = sld [smem:[#allocation7 + $0x80]]
    %v166 = vstv %s165
    %v167 = vmul.f32 %v166, %v90
    %v168 = vmul.f32 %v166, %v91
    %v169 = vadd.f32 %v167, 0.0
    %v170 = vadd.f32 %v168, 0.0
    %s171 = sld [smem:[#allocation7 + $0x81]]
    %v172 = vstv %s171
    %v173 = vmul.f32 %v172, %v90
    %v174 = vmul.f32 %v172, %v91
    %177 = vrot.lane.b32.xlu0 %v173, 127
    %v178 = vpop.permute.xlu0 %177
    %179 = vrot.lane.b32.xlu0 %v174, 127
    %v180 = vpop.permute.xlu0 %179
    %v183 = vadd.f32 %v169, %v178
    %v184 = vadd.f32 %v170, %v180
    %s185 = sld [smem:[#allocation7 + $0x82]]
    %v186 = vstv %s185
    %v187 = vmul.f32 %v186, %v90
    %v188 = vmul.f32 %v186, %v91
    %v191 = vrot.slane %v187, 1
    %v192 = vrot.slane %v188, 1
    %v195 = vadd.f32 %v183, %v191
    %v196 = vadd.f32 %v184, %v192
    %s197 = sld [smem:[#allocation7 + $0x83]]
    %v198 = vstv %s197
    %v199 = vmul.f32 %v198, %v90
    %v200 = vmul.f32 %v198, %v91
    %v203 = vrot.slane %v199, 1
    %v204 = vrot.slane %v200, 1
    %205 = vrot.lane.b32.xlu0 %v203, 127
    %v206 = vpop.permute.xlu0 %205
    %207 = vrot.lane.b32.xlu0 %v204, 127
    %v208 = vpop.permute.xlu0 %207
    %v211 = vadd.f32 %v195, %v206
    %v212 = vadd.f32 %v196, %v208
    %v213 = vstv %s164
    %v214 = vadd.f32 %v213, %v211
    %v215 = vadd.f32 %v213, %v212
    %v216 = vmax.f32 %v214, 0.0
    %v217 = vmax.f32 %v215, 0.0
    %220 = vrot.lane.b32.xlu0 %v216, 127
    %v221 = vpop.permute.xlu0 %220
    %222 = vrot.lane.b32.xlu0 %v217, 127
    %v223 = vpop.permute.xlu0 %222
    %v226 = vmax.f32 %v216, %v221
    %v227 = vmax.f32 %v217, %v223
    %v230 = vrot.slane %v226, 1
    %v231 = vrot.slane %v227, 1
    %v234 = vmax.f32 %v226, %v230
    %v235 = vmax.f32 %v227, %v231
    %s236 = sld [smem:[#allocation8 + $0x2]]
    %s237 = sld [smem:[#allocation7 + $0x100]]
    %v238 = vstv %s237
    %v239 = vmul.f32 %v238, %v90
    %v240 = vmul.f32 %v238, %v91
    %v241 = vadd.f32 %v239, 0.0
    %v242 = vadd.f32 %v240, 0.0
    %s243 = sld [smem:[#allocation7 + $0x101]]
    %v244 = vstv %s243
    %v245 = vmul.f32 %v244, %v90
    %v246 = vmul.f32 %v244, %v91
    %249 = vrot.lane.b32.xlu0 %v245, 127
    %v250 = vpop.permute.xlu0 %249
    %251 = vrot.lane.b32.xlu0 %v246, 127
    %v252 = vpop.permute.xlu0 %251
    %v255 = vadd.f32 %v241, %v250
    %v256 = vadd.f32 %v242, %v252
    %s257 = sld [smem:[#allocation7 + $0x102]]
    %v258 = vstv %s257
    %v259 = vmul.f32 %v258, %v90
    %v260 = vmul.f32 %v258, %v91
    %v263 = vrot.slane %v259, 1
    %v264 = vrot.slane %v260, 1
    %v267 = vadd.f32 %v255, %v263
    %v268 = vadd.f32 %v256, %v264
    %s269 = sld [smem:[#allocation7 + $0x103]]
    %v270 = vstv %s269
    %v271 = vmul.f32 %v270, %v90
    %v272 = vmul.f32 %v270, %v91
    %v275 = vrot.slane %v271, 1
    %v276 = vrot.slane %v272, 1
    %277 = vrot.lane.b32.xlu0 %v275, 127
    %v278 = vpop.permute.xlu0 %277
    %279 = vrot.lane.b32.xlu0 %v276, 127
    %v280 = vpop.permute.xlu0 %279
    %v283 = vadd.f32 %v267, %v278
    %v284 = vadd.f32 %v268, %v280
    %v285 = vstv %s236
    %v286 = vadd.f32 %v285, %v283
    %v287 = vadd.f32 %v285, %v284
    %v288 = vmax.f32 %v286, 0.0
    %v289 = vmax.f32 %v287, 0.0
    %292 = vrot.lane.b32.xlu0 %v288, 127
    %v293 = vpop.permute.xlu0 %292
    %294 = vrot.lane.b32.xlu0 %v289, 127
    %v295 = vpop.permute.xlu0 %294
    %v298 = vmax.f32 %v288, %v293
    %v299 = vmax.f32 %v289, %v295
    %v302 = vrot.slane %v298, 1
    %v303 = vrot.slane %v299, 1
    %v306 = vmax.f32 %v298, %v302
    %v307 = vmax.f32 %v299, %v303
    %s308 = sld [smem:[#allocation8 + $0x3]]
    %s309 = sld [smem:[#allocation7 + $0x180]]
    %v310 = vstv %s309
    %v311 = vmul.f32 %v310, %v90
    %v312 = vmul.f32 %v310, %v91
    %v313 = vadd.f32 %v311, 0.0
    %v314 = vadd.f32 %v312, 0.0
    %s315 = sld [smem:[#allocation7 + $0x181]]
    %v316 = vstv %s315
    %v317 = vmul.f32 %v316, %v90
    %v318 = vmul.f32 %v316, %v91
    %321 = vrot.lane.b32.xlu0 %v317, 127
    %v322 = vpop.permute.xlu0 %321
    %323 = vrot.lane.b32.xlu0 %v318, 127
    %v324 = vpop.permute.xlu0 %323
    %v327 = vadd.f32 %v313, %v322
    %v328 = vadd.f32 %v314, %v324
    %s329 = sld [smem:[#allocation7 + $0x182]]
    %v330 = vstv %s329
    %v331 = vmul.f32 %v330, %v90
    %v332 = vmul.f32 %v330, %v91
    %v335 = vrot.slane %v331, 1
    %v336 = vrot.slane %v332, 1
    %v339 = vadd.f32 %v327, %v335
    %v340 = vadd.f32 %v328, %v336
    %s341 = sld [smem:[#allocation7 + $0x183]]
    %v342 = vstv %s341
    %v343 = vmul.f32 %v342, %v90
    %v344 = vmul.f32 %v342, %v91
    %v347 = vrot.slane %v343, 1
    %v348 = vrot.slane %v344, 1
    %349 = vrot.lane.b32.xlu0 %v347, 127
    %v350 = vpop.permute.xlu0 %349
    %351 = vrot.lane.b32.xlu0 %v348, 127
    %v352 = vpop.permute.xlu0 %351
    %v355 = vadd.f32 %v339, %v350
    %v356 = vadd.f32 %v340, %v352
    %v357 = vstv %s308
    %v358 = vadd.f32 %v357, %v355
    %v359 = vadd.f32 %v357, %v356
    %v360 = vmax.f32 %v358, 0.0
    %v361 = vmax.f32 %v359, 0.0
    %364 = vrot.lane.b32.xlu0 %v360, 127
    %v365 = vpop.permute.xlu0 %364
    %366 = vrot.lane.b32.xlu0 %v361, 127
    %v367 = vpop.permute.xlu0 %366
    %v370 = vmax.f32 %v360, %v365
    %v371 = vmax.f32 %v361, %v367
    %v374 = vrot.slane %v370, 1
    %v375 = vrot.slane %v371, 1
    %v378 = vmax.f32 %v370, %v374
    %v379 = vmax.f32 %v371, %v375
    %v382 = vrot.slane %v142, 1
    %v383 = vrot.slane %v143, 1
    %384 = vrot.lane.b32.xlu0 %v382, 5
    %v385 = vpop.permute.xlu0 %384
    %386 = vrot.lane.b32.xlu0 %v383, 5
    %v387 = vpop.permute.xlu0 %386
    %v390 = vrot.slane %v142, 2
    %v391 = vrot.slane %v143, 2
    %392 = vrot.lane.b32.xlu0 %v390, 10
    %v393 = vpop.permute.xlu0 %392
    %394 = vrot.lane.b32.xlu0 %v391, 10
    %v395 = vpop.permute.xlu0 %394
    %v398 = vrot.slane %v142, 3
    %v399 = vrot.slane %v143, 3
    %400 = vrot.lane.b32.xlu0 %v398, 15
    %v401 = vpop.permute.xlu0 %400
    %402 = vrot.lane.b32.xlu0 %v399, 15
    %v403 = vpop.permute.xlu0 %402
    %v406 = vrot.slane %v142, 4
    %v407 = vrot.slane %v143, 4
    %408 = vrot.lane.b32.xlu0 %v406, 20
    %v409 = vpop.permute.xlu0 %408
    %410 = vrot.lane.b32.xlu0 %v407, 20
    %v411 = vpop.permute.xlu0 %410
    %416 = vrot.lane.b32.xlu0 %v214, 25
    %v417 = vpop.permute.xlu0 %416
    %418 = vrot.lane.b32.xlu0 %v215, 25
    %v419 = vpop.permute.xlu0 %418
    %v422 = vrot.slane %v214, 1
    %v423 = vrot.slane %v215, 1
    %424 = vrot.lane.b32.xlu0 %v422, 30
    %v425 = vpop.permute.xlu0 %424
    %426 = vrot.lane.b32.xlu0 %v423, 30
    %v427 = vpop.permute.xlu0 %426
    %v430 = vrot.slane %v214, 2
    %v431 = vrot.slane %v215, 2
    %432 = vrot.lane.b32.xlu0 %v430, 35
    %v433 = vpop.permute.xlu0 %432
    %434 = vrot.lane.b32.xlu0 %v431, 35
    %v435 = vpop.permute.xlu0 %434
    %v438 = vrot.slane %v214, 3
    %v439 = vrot.slane %v215, 3
    %440 = vrot.lane.b32.xlu0 %v438, 40
    %v441 = vpop.permute.xlu0 %440
    %442 = vrot.lane.b32.xlu0 %v439, 40
    %v443 = vpop.permute.xlu0 %442
    %v446 = vrot.slane %v214, 4
    %v447 = vrot.slane %v215, 4
    %448 = vrot.lane.b32.xlu0 %v446, 45
    %v449 = vpop.permute.xlu0 %448
    %450 = vrot.lane.b32.xlu0 %v447, 45
    %v451 = vpop.permute.xlu0 %450
    %456 = vrot.lane.b32.xlu0 %v286, 50
    %v457 = vpop.permute.xlu0 %456
    %458 = vrot.lane.b32.xlu0 %v287, 50
    %v459 = vpop.permute.xlu0 %458
    %v462 = vrot.slane %v286, 1
    %v463 = vrot.slane %v287, 1
    %464 = vrot.lane.b32.xlu0 %v462, 55
    %v465 = vpop.permute.xlu0 %464
    %466 = vrot.lane.b32.xlu0 %v463, 55
    %v467 = vpop.permute.xlu0 %466
    %v470 = vrot.slane %v286, 2
    %v471 = vrot.slane %v287, 2
    %472 = vrot.lane.b32.xlu0 %v470, 60
    %v473 = vpop.permute.xlu0 %472
    %474 = vrot.lane.b32.xlu0 %v471, 60
    %v475 = vpop.permute.xlu0 %474
    %v478 = vrot.slane %v286, 3
    %v479 = vrot.slane %v287, 3
    %480 = vrot.lane.b32.xlu0 %v478, 65
    %v481 = vpop.permute.xlu0 %480
    %482 = vrot.lane.b32.xlu0 %v479, 65
    %v483 = vpop.permute.xlu0 %482
    %v486 = vrot.slane %v286, 4
    %v487 = vrot.slane %v287, 4
    %488 = vrot.lane.b32.xlu0 %v486, 70
    %v489 = vpop.permute.xlu0 %488
    %490 = vrot.lane.b32.xlu0 %v487, 70
    %v491 = vpop.permute.xlu0 %490
    %496 = vrot.lane.b32.xlu0 %v358, 75
    %v497 = vpop.permute.xlu0 %496
    %498 = vrot.lane.b32.xlu0 %v359, 75
    %v499 = vpop.permute.xlu0 %498
    %vm502 = vcmask 39936
    %v503 = vsel %vm502, %v142, %v385
    %v504 = vsel %vm502, %v143, %v387
    %vm505 = vcmask 80896
    %v506 = vsel %vm505, %v503, %v393
    %v507 = vsel %vm505, %v504, %v395
    %vm508 = vcmask 121856
    %v509 = vsel %vm508, %v506, %v401
    %v510 = vsel %vm508, %v507, %v403
    %vm511 = vcmask 162816
    %v512 = vsel %vm511, %v509, %v409
    %v513 = vsel %vm511, %v510, %v411
    %vm514 = vcmask 203776
    %v515 = vsel %vm514, %v512, %v417
    %v516 = vsel %vm514, %v513, %v419
    %vm517 = vcmask 244736
    %v518 = vsel %vm517, %v515, %v425
    %v519 = vsel %vm517, %v516, %v427
    %vm520 = vcmask 285696
    %v521 = vsel %vm520, %v518, %v433
    %v522 = vsel %vm520, %v519, %v435
    %vm523 = vcmask 326656
    %v524 = vsel %vm523, %v521, %v441
    %v525 = vsel %vm523, %v522, %v443
    %vm526 = vcmask 367616
    %v527 = vsel %vm526, %v524, %v449
    %v528 = vsel %vm526, %v525, %v451
    %vm529 = vcmask 408576
    %v530 = vsel %vm529, %v527, %v457
    %v531 = vsel %vm529, %v528, %v459
    %vm532 = vcmask 449536
    %v533 = vsel %vm532, %v530, %v465
    %v534 = vsel %vm532, %v531, %v467
    %vm535 = vcmask 490496
    %v536 = vsel %vm535, %v533, %v473
    %v537 = vsel %vm535, %v534, %v475
    %vm538 = vcmask 531456
    %v539 = vsel %vm538, %v536, %v481
    %v540 = vsel %vm538, %v537, %v483
    %vm541 = vcmask 572416
    %v542 = vsel %vm541, %v539, %v489
    %v543 = vsel %vm541, %v540, %v491
    %vm544 = vcmask 613376
    %v545 = vsel %vm544, %v542, %v497
    %v546 = vsel %vm544, %v543, %v499
    %v547 = vrot.slane %v358, 1
    %v548 = vrot.slane %v359, 1
    %549 = vrot.lane.b32.xlu0 %v547, 5
    %v550 = vpop.permute.xlu0 %549
    %551 = vrot.lane.b32.xlu0 %v548, 5
    %v552 = vpop.permute.xlu0 %551
    %v555 = vrot.slane %v358, 2
    %v556 = vrot.slane %v359, 2
    %557 = vrot.lane.b32.xlu0 %v555, 10
    %v558 = vpop.permute.xlu0 %557
    %559 = vrot.lane.b32.xlu0 %v556, 10
    %v560 = vpop.permute.xlu0 %559
    %v563 = vrot.slane %v358, 3
    %v564 = vrot.slane %v359, 3
    %565 = vrot.lane.b32.xlu0 %v563, 15
    %v566 = vpop.permute.xlu0 %565
    %567 = vrot.lane.b32.xlu0 %v564, 15
    %v568 = vpop.permute.xlu0 %567
    %v571 = vsel %vm502, %v358, %v550
    %v572 = vsel %vm502, %v359, %v552
    %v573 = vsel %vm505, %v571, %v558
    %v574 = vsel %vm505, %v572, %v560
    %v575 = vsel %vm508, %v573, %v566
    %v576 = vsel %vm508, %v574, %v568
    %v579 = vrot.slane %v575, 1
    %v580 = vrot.slane %v576, 1
    %581 = vrot.lane.b32.xlu0 %v579, 80
    %v582 = vpop.permute.xlu0 %581
    %583 = vrot.lane.b32.xlu0 %v580, 80
    %v584 = vpop.permute.xlu0 %583
    %vm587 = vcmask 654336
    %v588 = vsel %vm587, %v545, %v582
    %v589 = vsel %vm587, %v546, %v584
    %v592 = vrot.slane %v162, 1
    %v593 = vrot.slane %v163, 1
    %594 = vrot.lane.b32.xlu0 %v592, 4
    %v595 = vpop.permute.xlu0 %594
    %596 = vrot.lane.b32.xlu0 %v593, 4
    %v597 = vpop.permute.xlu0 %596
    %v600 = vrot.slane %v162, 2
    %v601 = vrot.slane %v163, 2
    %602 = vrot.lane.b32.xlu0 %v600, 8
    %v603 = vpop.permute.xlu0 %602
    %604 = vrot.lane.b32.xlu0 %v601, 8
    %v605 = vpop.permute.xlu0 %604
    %v608 = vrot.slane %v162, 3
    %v609 = vrot.slane %v163, 3
    %610 = vrot.lane.b32.xlu0 %v608, 12
    %v611 = vpop.permute.xlu0 %610
    %612 = vrot.lane.b32.xlu0 %v609, 12
    %v613 = vpop.permute.xlu0 %612
    %618 = vrot.lane.b32.xlu0 %v234, 16
    %v619 = vpop.permute.xlu0 %618
    %620 = vrot.lane.b32.xlu0 %v235, 16
    %v621 = vpop.permute.xlu0 %620
    %v624 = vrot.slane %v234, 1
    %v625 = vrot.slane %v235, 1
    %626 = vrot.lane.b32.xlu0 %v624, 20
    %v627 = vpop.permute.xlu0 %626
    %628 = vrot.lane.b32.xlu0 %v625, 20
    %v629 = vpop.permute.xlu0 %628
    %v632 = vrot.slane %v234, 2
    %v633 = vrot.slane %v235, 2
    %634 = vrot.lane.b32.xlu0 %v632, 24
    %v635 = vpop.permute.xlu0 %634
    %636 = vrot.lane.b32.xlu0 %v633, 24
    %v637 = vpop.permute.xlu0 %636
    %v640 = vrot.slane %v234, 3
    %v641 = vrot.slane %v235, 3
    %642 = vrot.lane.b32.xlu0 %v640, 28
    %v643 = vpop.permute.xlu0 %642
    %644 = vrot.lane.b32.xlu0 %v641, 28
    %v645 = vpop.permute.xlu0 %644
    %650 = vrot.lane.b32.xlu0 %v306, 32
    %v651 = vpop.permute.xlu0 %650
    %652 = vrot.lane.b32.xlu0 %v307, 32
    %v653 = vpop.permute.xlu0 %652
    %v656 = vrot.slane %v306, 1
    %v657 = vrot.slane %v307, 1
    %658 = vrot.lane.b32.xlu0 %v656, 36
    %v659 = vpop.permute.xlu0 %658
    %660 = vrot.lane.b32.xlu0 %v657, 36
    %v661 = vpop.permute.xlu0 %660
    %v664 = vrot.slane %v306, 2
    %v665 = vrot.slane %v307, 2
    %666 = vrot.lane.b32.xlu0 %v664, 40
    %v667 = vpop.permute.xlu0 %666
    %668 = vrot.lane.b32.xlu0 %v665, 40
    %v669 = vpop.permute.xlu0 %668
    %v672 = vrot.slane %v306, 3
    %v673 = vrot.slane %v307, 3
    %674 = vrot.lane.b32.xlu0 %v672, 44
    %v675 = vpop.permute.xlu0 %674
    %676 = vrot.lane.b32.xlu0 %v673, 44
    %v677 = vpop.permute.xlu0 %676
    %682 = vrot.lane.b32.xlu0 %v378, 48
    %v683 = vpop.permute.xlu0 %682
    %684 = vrot.lane.b32.xlu0 %v379, 48
    %v685 = vpop.permute.xlu0 %684
    %v688 = vrot.slane %v378, 1
    %v689 = vrot.slane %v379, 1
    %690 = vrot.lane.b32.xlu0 %v688, 52
    %v691 = vpop.permute.xlu0 %690
    %692 = vrot.lane.b32.xlu0 %v689, 52
    %v693 = vpop.permute.xlu0 %692
    %v696 = vrot.slane %v378, 2
    %v697 = vrot.slane %v379, 2
    %698 = vrot.lane.b32.xlu0 %v696, 56
    %v699 = vpop.permute.xlu0 %698
    %700 = vrot.lane.b32.xlu0 %v697, 56
    %v701 = vpop.permute.xlu0 %700
    %v704 = vrot.slane %v378, 3
    %v705 = vrot.slane %v379, 3
    %706 = vrot.lane.b32.xlu0 %v704, 60
    %v707 = vpop.permute.xlu0 %706
    %708 = vrot.lane.b32.xlu0 %v705, 60
    %v709 = vpop.permute.xlu0 %708
    %vm712 = vcmask 31744
    %v713 = vsel %vm712, %v162, %v595
    %v714 = vsel %vm712, %v163, %v597
    %vm715 = vcmask 64512
    %v716 = vsel %vm715, %v713, %v603
    %v717 = vsel %vm715, %v714, %v605
    %vm718 = vcmask 97280
    %v719 = vsel %vm718, %v716, %v611
    %v720 = vsel %vm718, %v717, %v613
    %vm721 = vcmask 130048
    %v722 = vsel %vm721, %v719, %v619
    %v723 = vsel %vm721, %v720, %v621
    %v724 = vsel %vm511, %v722, %v627
    %v725 = vsel %vm511, %v723, %v629
    %vm726 = vcmask 195584
    %v727 = vsel %vm726, %v724, %v635
    %v728 = vsel %vm726, %v725, %v637
    %vm729 = vcmask 228352
    %v730 = vsel %vm729, %v727, %v643
    %v731 = vsel %vm729, %v728, %v645
    %vm732 = vcmask 261120
    %v733 = vsel %vm732, %v730, %v651
    %v734 = vsel %vm732, %v731, %v653
    %vm735 = vcmask 293888
    %v736 = vsel %vm735, %v733, %v659
    %v737 = vsel %vm735, %v734, %v661
    %v738 = vsel %vm523, %v736, %v667
    %v739 = vsel %vm523, %v737, %v669
    %vm740 = vcmask 359424
    %v741 = vsel %vm740, %v738, %v675
    %v742 = vsel %vm740, %v739, %v677
    %vm743 = vcmask 392192
    %v744 = vsel %vm743, %v741, %v683
    %v745 = vsel %vm743, %v742, %v685
    %vm746 = vcmask 424960
    %v747 = vsel %vm746, %v744, %v691
    %v748 = vsel %vm746, %v745, %v693
    %vm749 = vcmask 457728
    %v750 = vsel %vm749, %v747, %v699
    %v751 = vsel %vm749, %v748, %v701
    %v752 = vsel %vm535, %v750, %v707
    %v753 = vsel %vm535, %v751, %v709
    %vm754 = vcmask 811008
    %755 = vst.msk [vmem:[%s6] sm:$0x1] %vm754, %v588
    %756 = vst.msk [vmem:[%s6 + $0x1] sm:$0x1] %vm754, %v589
    %vm757 = vcmask 516096
    %758 = vst.msk [vmem:[%s7] sm:$0x1] %vm757, %v752
    %759 = vst.msk [vmem:[%s7 + $0x1] sm:$0x1] %vm757, %v753
    %v760 = vld [vmem:[%s3] sm:$0x3]
    %v761 = vmul.f32 %v752, %v760
    %v762 = vmul.f32 %v753, %v760
    %v763 = vsel %vm757, %v761, 0.0
    %764 = vadd.xlane.f32.xlu0 %v763
    %v765 = vpop.xlane.xlu0 %764
    %v766 = vsel %vm757, %v762, 0.0
    %767 = vadd.xlane.f32.xlu0 %v766
    %v768 = vpop.xlane.xlu0 %767
    %s769 = sld [smem:[#allocation10]]
    %v770 = vstv %s769
    %v771 = vadd.f32 %v765, %v770
    %v772 = vadd.f32 %v768, %v770
    %v774 = vrot.slane %v760, 1
    %v776 = vmul.f32 %v752, %v774
    %v777 = vmul.f32 %v753, %v774
    %v778 = vsel %vm757, %v776, 0.0
    %779 = vadd.xlane.f32.xlu0 %v778
    %v780 = vpop.xlane.xlu0 %779
    %v781 = vsel %vm757, %v777, 0.0
    %782 = vadd.xlane.f32.xlu0 %v781
    %v783 = vpop.xlane.xlu0 %782
    %s784 = sld [smem:[#allocation10 + $0x1]]
    %v785 = vstv %s784
    %v786 = vadd.f32 %v780, %v785
    %v787 = vadd.f32 %v783, %v785
    %vm788 = vcmask 7168
    %v789 = vsel %vm788, %v771, %v786
    %v790 = vsel %vm788, %v772, %v787
    %vm791 = vcmask 8192
    %792 = vst.msk [vmem:[#allocation11] sm:$0x1] %vm791, %v789
    %793 = vst.msk [vmem:[#allocation11 + $0x1] sm:$0x1] %vm791, %v790
    // Predicated region
    $region38: #{simple_cnn_forward.1} parent=1 // pred_check
      _
    $region39: #{simple_cnn_forward.1} parent=1 // pred_check_branch
      %795 = sbr.rel (0) target = $region41
    $region40: #{simple_cnn_forward.1} parent=1 // pred_region
      %s797 = ssub.s32 32, 32
      %798 = vsyncadd [#allocation5], %s797
      %s799 = sshll.u32 [#allocation11], 4
      %s800 = int_to_ptr.vmem [resolvable:$true] %s799
      %805 = dma.vmem_to_hbm [thread:$0]  %s800, 32, %s5, [#allocation5], 16, 16, 1
    $region41: #{simple_cnn_forward.1} parent=1 // pred_fallthru
      _
    // Predicated region
    $region42: #{simple_cnn_forward.1} parent=1 // pred_check
      _
    $region43: #{simple_cnn_forward.1} parent=1 // pred_check_branch
      %807 = sbr.rel (0) target = $region45
    $region44: #{simple_cnn_forward.1} parent=1 // pred_region
      _
    $region45: #{simple_cnn_forward.1} parent=1 // pred_fallthru
      _
    // Predicated region
    $region46: #{simple_cnn_forward.1} parent=1 // pred_check
      _
    $region47: #{simple_cnn_forward.1} parent=1 // pred_check_branch
      %809 = sbr.rel (0) target = $region49
    $region48: #{simple_cnn_forward.1} parent=1 // pred_region
      _
    $region49: #{simple_cnn_forward.1} parent=1 // pred_fallthru
      _
    // Predicated region
    $region50: #{simple_cnn_forward.1} parent=1 // pred_check
      _
    $region51: #{simple_cnn_forward.1} parent=1 // pred_check_branch
      %811 = sbr.rel (0) target = $region53
    $region52: #{simple_cnn_forward.1} parent=1 // pred_region
      %812 = dma.done [#allocation5], 32
    $region53: #{simple_cnn_forward.1} parent=1 // pred_fallthru
      _
    // Predicated region
    $region54: #{simple_cnn_forward.1} parent=1 // pred_check
      _
    $region55: #{simple_cnn_forward.1} parent=1 // pred_check_branch
      %814 = sbr.rel (0) target = $region57
    $region56: #{simple_cnn_forward.1} parent=1 // pred_region
      _
    $region57: #{simple_cnn_forward.1} parent=1 // pred_fallthru
      _
    // Predicated region
    $region58: #{simple_cnn_forward.1} parent=1 // pred_check
      _
    $region59: #{simple_cnn_forward.1} parent=1 // pred_check_branch
      %816 = sbr.rel (0) target = $region61
    $region60: #{simple_cnn_forward.1} parent=1 // pred_region
      _
    $region61: #{simple_cnn_forward.1} parent=1 // pred_fallthru
      _
    %817 = vsyncpa [#allocation4], 1
    %818 = vsyncpa [#allocation5], 1
    %819 = vsyncpa [#allocation6], 1
    %820 = vsyncpa [#allocation9], 1

</llo_original>
